<compile_context>
chip_gen: v5e
topology: v5e:2x2
jax: 0.10.0
libtpu: 0.0.40
codegen_flags: <defaults>
</compile_context>

<pallas_src>
import functools
from typing import NamedTuple

import jax
import jax.numpy as jnp
from jax.experimental import pallas as pl
from jax.experimental.pallas import tpu as pltpu

SEC = 16  # row alignment of slab sections (native sublane tile for bf16, 2x f32)


def _round_up(n, m):
    return ((n + m - 1) // m) * m


class PackedParams(NamedTuple):
    slab: jax.Array      # (F_pad + 2*SEC + H, H), param_dtype
    f_pad: int
    input_size: int
    hidden: int
    num_classes: int


def rnn_fc_kernel(x_ref, p_ref, out_ref, *, f_pad, hidden, sec):
    """x:(TM,F_pad)  p:(F_pad+2*sec+hidden, hidden)  out:(TM, hidden)."""
    x = x_ref[...]                                           # bf16 (or f32)
    w1 = p_ref[0:f_pad, :]                                   # (F_pad, H), same dtype as x
    b1 = p_ref[f_pad:f_pad + 1, :].astype(jnp.float32)       # (1, H)
    w2 = p_ref[f_pad + sec:f_pad + sec + hidden, :].astype(jnp.float32)   # (H, H)
    b2 = p_ref[f_pad + sec + hidden:f_pad + sec + hidden + 1, :].astype(jnp.float32)

    # Single tanh RNN step (h0 == 0: recurrent matmul dropped, b_hh folded in).
    # bf16 x bf16 MXU matmul with f32 accumulate; bias add + tanh stay in f32.
    h1 = jnp.tanh(jnp.dot(x, w1, preferred_element_type=jnp.float32) + b1)
    # FC head on the (only) timestep; lane-dense H-wide store.
    out = jnp.dot(h1, w2, preferred_element_type=jnp.float32) + b2
    out_ref[...] = out.astype(out_ref.dtype)


def prepare_params(w_ih, w_hh, b_ih, b_hh, w_fc, b_fc, *, param_dtype=jnp.bfloat16):
    """One-time parameter packing (hoisted out of the per-call path).

    PyTorch convention in:  w_ih (H,F), w_hh (H,H), b_ih (H,), b_hh (H,),
                            w_fc (C,H), b_fc (C,).
    Returns a single (F_pad + 2*SEC + H, H) slab in `param_dtype`.
    w_hh is unused: valid only because seq_len == 1 and h0 == 0.
    """
    H, F = w_ih.shape
    C = w_fc.shape[0]
    assert H % 128 == 0, "hidden size must be a multiple of 128 (lane width)"
    assert C <= H, "class count must fit in the lane-padded head"
    del w_hh  # h0 == 0 -> its contribution is exactly zero

    f_pad = _round_up(F, SEC)
    rows = f_pad + 2 * SEC + H
    slab = jnp.zeros((rows, H), jnp.float32)
    slab = slab.at[:F, :].set(jnp.transpose(w_ih))                         # w1
    slab = slab.at[f_pad:f_pad + SEC, :].set(
        jnp.broadcast_to((b_ih + b_hh)[None, :], (SEC, H)))                # b1 (replicated)
    slab = slab.at[f_pad + SEC:f_pad + SEC + H, :C].set(jnp.transpose(w_fc))  # w2 (lane-padded)
    slab = slab.at[f_pad + SEC + H:rows, :C].set(
        jnp.broadcast_to(b_fc[None, :], (SEC, C)))                         # b2 (replicated)
    slab = slab.astype(param_dtype)
    return PackedParams(slab=slab, f_pad=f_pad, input_size=F, hidden=H, num_classes=C)


def _batch_tiling(batch):
    """Pick (padded_batch, row_tile). Large roofline-sized tiles at production B."""
    if batch >= 256:
        bp = _round_up(batch, 256)
        tm = max(t for t in (1024, 512, 256) if bp % t == 0)
    else:
        bp = _round_up(batch, SEC)
        tm = bp
    return bp, tm


def rnn_forward(x, packed: PackedParams, *, out_dtype=jnp.float32):
    """x: (B, input_size) float32.  Returns (B, num_classes) logits."""
    B, F = x.shape
    assert F == packed.input_size
    H, f_pad = packed.hidden, packed.f_pad

    x = x.astype(packed.slab.dtype)
    if f_pad != F:
        x = jnp.pad(x, ((0, 0), (0, f_pad - F)))
    bp, tm = _batch_tiling(B)
    if bp != B:
        x = jnp.pad(x, ((0, bp - B), (0, 0)))

    kernel = functools.partial(rnn_fc_kernel, f_pad=f_pad, hidden=H, sec=SEC)
    out_padded = pl.pallas_call(
        kernel,
        out_shape=jax.ShapeDtypeStruct((bp, H), out_dtype),
        grid=(bp // tm,),
        in_specs=[
            pl.BlockSpec((tm, f_pad), lambda i: (i, 0)),          # batch-tiled x
            pl.BlockSpec(packed.slab.shape, lambda i: (0, 0)),    # resident param slab
        ],
        out_specs=pl.BlockSpec((tm, H), lambda i: (i, 0)),
        compiler_params=pltpu.CompilerParams(dimension_semantics=("parallel",)),
    )(x, packed.slab)

    return out_padded[:B, :packed.num_classes]


def init_params(key, input_size, hidden_size, num_classes):
    """Deterministic init mimicking PyTorch defaults (uniform +/- 1/sqrt(fan))."""
    k = jax.random.split(key, 6)
    s = 1.0 / jnp.sqrt(hidden_size)
    w_ih = jax.random.uniform(k[0], (hidden_size, input_size), jnp.float32, -s, s)
    w_hh = jax.random.uniform(k[1], (hidden_size, hidden_size), jnp.float32, -s, s)
    b_ih = jax.random.uniform(k[2], (hidden_size,), jnp.float32, -s, s)
    b_hh = jax.random.uniform(k[3], (hidden_size,), jnp.float32, -s, s)
    w_fc = jax.random.uniform(k[4], (num_classes, hidden_size), jnp.float32, -s, s)
    b_fc = jax.random.uniform(k[5], (num_classes,), jnp.float32, -s, s)
    return w_ih, w_hh, b_ih, b_hh, w_fc, b_fc


if __name__ == "__main__":
    # batch, input_size (features), hidden (spec: hidden_size=128), num_classes
    B, F, H, C = 8, 16, 128, 4

    key = jax.random.PRNGKey(0)
    kx, kp = jax.random.split(key)
    x = jax.random.normal(kx, (B, F), dtype=jnp.float32)
    params = init_params(kp, F, H, C)

    packed = prepare_params(*params, param_dtype=jnp.bfloat16)  # one-time prep
    out = rnn_forward(x, packed)
    out = jax.block_until_ready(out)
    assert out.shape == (B, C)

    # References for the original PyTorch math (h0 = 0).
    w_ih, w_hh, b_ih, b_hh, w_fc, b_fc = params
    h0 = jnp.zeros((B, H), jnp.float32)

    # (a) Tight check against a reference using identically bf16-quantized
    #     weights/activations (matches the kernel's MXU inputs, f32 accumulate).
    q = lambda a: a.astype(jnp.bfloat16).astype(jnp.float32)
    h1_q = jnp.tanh(q(x) @ q(w_ih.T) + q(b_ih + b_hh))
    ref_q = h1_q @ q(w_fc.T) + q(b_fc)
    assert jnp.allclose(out, ref_q, atol=1e-3, rtol=1e-3)

    # (b) Loose sanity check against the pure-f32 reference (bf16 weight error).
    h1 = jnp.tanh(x @ w_ih.T + b_ih + h0 @ w_hh.T + b_hh)
    ref = h1 @ w_fc.T + b_fc
    assert jnp.allclose(out, ref, atol=5e-2, rtol=5e-2)

    print("KERNEL_OK")
</pallas_src>

<mosaic_0001>
module attributes {stable_mosaic.version = 11 : i64} {
  func.func @rnn_fc_kernel(%arg0: i32, %arg1: memref<16x16xbf16, #tpu.memory_space<vmem>>, %arg2: memref<176x128xbf16, #tpu.memory_space<vmem>>, %arg3: memref<16x128xf32, #tpu.memory_space<vmem>>) attributes {dimension_semantics = [#tpu.dimension_semantics<parallel>], iteration_bounds = array<i64: 1>, scalar_prefetch = 0 : i64, scratch_operands = 0 : i64, tpu.core_type = #tpu.core_type<tc>, window_params = [{transform_indices = @transform_0, window_bounds = array<i64: 16, 16>}, {pipeline_mode = #tpu.pipeline_mode<synchronous>, transform_indices = @transform_1, window_bounds = array<i64: 176, 128>}, {transform_indices = @transform_2, window_bounds = array<i64: 16, 128>}]} {
    %c0 = arith.constant 0 : index
    %c0_0 = arith.constant 0 : index
    %0 = vector.load %arg1[%c0, %c0_0] : memref<16x16xbf16, #tpu.memory_space<vmem>>, vector<16x16xbf16>
    %c0_1 = arith.constant 0 : index
    %c0_2 = arith.constant 0 : index
    %1 = vector.load %arg2[%c0_1, %c0_2] : memref<176x128xbf16, #tpu.memory_space<vmem>>, vector<16x128xbf16>
    %c16 = arith.constant 16 : index
    %c0_3 = arith.constant 0 : index
    %2 = vector.load %arg2[%c16, %c0_3] : memref<176x128xbf16, #tpu.memory_space<vmem>>, vector<1x128xbf16>
    %3 = arith.extf %2 : vector<1x128xbf16> to vector<1x128xf32>
    %c32 = arith.constant 32 : index
    %c0_4 = arith.constant 0 : index
    %4 = vector.load %arg2[%c32, %c0_4] : memref<176x128xbf16, #tpu.memory_space<vmem>>, vector<128x128xbf16>
    %5 = arith.extf %4 : vector<128x128xbf16> to vector<128x128xf32>
    %c160 = arith.constant 160 : index
    %c0_5 = arith.constant 0 : index
    %6 = vector.load %arg2[%c160, %c0_5] : memref<176x128xbf16, #tpu.memory_space<vmem>>, vector<1x128xbf16>
    %7 = arith.extf %6 : vector<1x128xbf16> to vector<1x128xf32>
    %cst = arith.constant dense<0.000000e+00> : vector<16x128xf32>
    %8 = tpu.matmul %0, %1, %cst {dimension_numbers = #tpu.dot_dimension_numbers<[1], [0], [0], [1], [0, 0, 1, 1], [], []>} : vector<16x16xbf16>, vector<16x128xbf16>, vector<16x128xf32> -> vector<16x128xf32>
    %9 = vector.broadcast %3 : vector<1x128xf32> to vector<16x128xf32>
    %10 = arith.addf %8, %9 : vector<16x128xf32>
    %11 = math.tanh %10 : vector<16x128xf32>
    %cst_6 = arith.constant dense<0.000000e+00> : vector<16x128xf32>
    %12 = tpu.matmul %11, %5, %cst_6 {dimension_numbers = #tpu.dot_dimension_numbers<[1], [0], [0], [1], [0, 0, 1, 1], [], []>} : vector<16x128xf32>, vector<128x128xf32>, vector<16x128xf32> -> vector<16x128xf32>
    %13 = vector.broadcast %7 : vector<1x128xf32> to vector<16x128xf32>
    %14 = arith.addf %12, %13 : vector<16x128xf32>
    %c0_7 = arith.constant 0 : index
    %c0_8 = arith.constant 0 : index
    %15 = vector.load %arg3[%c0_7, %c0_8] : memref<16x128xf32, #tpu.memory_space<vmem>>, vector<16x128xf32>
    tpu.vector_store %arg3[%c0_7, %c0_8], %14 {strides = array<i32>} : memref<16x128xf32, #tpu.memory_space<vmem>>, vector<16x128xf32>,
    return
  }
  func.func @transform_0(%arg0: i32) -> (i32, i32) {
    %c0_i32 = arith.constant 0 : i32
    %c0_i32_0 = arith.constant 0 : i32
    return %arg0, %c0_i32 : i32, i32
  }
  func.func @transform_1(%arg0: i32) -> (i32, i32) {
    %c0_i32 = arith.constant 0 : i32
    %c0_i32_0 = arith.constant 0 : i32
    %c0_i32_1 = arith.constant 0 : i32
    return %c0_i32, %c0_i32_0 : i32, i32
  }
  func.func @transform_2(%arg0: i32) -> (i32, i32) {
    %c0_i32 = arith.constant 0 : i32
    %c0_i32_0 = arith.constant 0 : i32
    return %arg0, %c0_i32 : i32, i32
  }
}

</mosaic_0001>

<llo_original>
// kernel: tpu_custom_call.1
$region0: #{tpu_custom_call.1}
  #allocation0 [shape = 'u32[]', space=smem, size = 0x4, offset = 0x4, fixed_abs, tag = 'smem constant byte address 0x4 - core index']
  #allocation1 [shape = 'u32[72,128]{1,0:T(1,128)}', space=vmem, size = 0x9000, scoped, tag = 'internal scratch']
  %s0 = inlined_call_operand.hbm [shape: bf16[16,16], index: 0, kind: input, shape index: {}]
  %s1 = inlined_call_operand.hbm [shape: bf16[176,128], index: 1, kind: input, shape index: {}]
  %s2 = inlined_call_operand.hbm [shape: f32[16,128], index: 2, kind: output, shape index: {}]
  %s3 = sld [smem:[#allocation0]]
  $region26: #{tpu_custom_call.1} parent=0
    _
  %s5 = ssub.s32 1, %s3
  %s6 = scalar_select 0, %s5, %s3
  $region1: #{tpu_custom_call.1} parent=0
    #allocation2 [shape = 'u8[4096]{0}', space=vmem, size = 0x1000, scoped, tag = 'input window, operand 0, single buffered']
    #allocation3 [shape = 's32[1]{0}', space=sflag, size = 0x4, scoped, tag = 'scoped memory for tpu_custom_call.1']
    #allocation4 [shape = 's32[1]{0}', space=sflag, size = 0x4, scoped, tag = 'scoped memory for tpu_custom_call.1']
    #allocation5 [shape = 'u8[45056]{0}', space=vmem, size = 0xb000, scoped, tag = 'input window, operand 1, single buffered']
    #allocation6 [shape = 's32[1]{0}', space=sflag, size = 0x4, scoped, tag = 'scoped memory for tpu_custom_call.1']
    #allocation7 [shape = 'u8[8192]{0}', space=vmem, size = 0x2000, scoped, tag = 'output window, operand 0, single buffered']
    %7 = vsyncpa [#allocation3], 0
    %8 = vsyncpa [#allocation6], 0
    %9 = vsyncpa [#allocation4], 0
    // Predicated region
    $region2: #{tpu_custom_call.1} parent=1 // pred_check
      _
    $region3: #{tpu_custom_call.1} parent=1 // pred_check_branch
      %11 = sbr.rel (0) target = $region5
    $region4: #{tpu_custom_call.1} parent=1 // pred_region
      %13 = vsyncadd [#allocation3], 0
      %s14 = sshll.u32 %s0, 4
      %s15 = int_to_ptr.hbm [resolvable:$true] %s14
      %s16 = sshll.u32 [#allocation2], 4
      %s17 = int_to_ptr.vmem [resolvable:$true] %s16
      %22 = dma.hbm_to_vmem [thread:$0]  %s15, 128, %s17, [#allocation3], 64, 64, 4
    $region5: #{tpu_custom_call.1} parent=1 // pred_fallthru
      _
    // Predicated region
    $region6: #{tpu_custom_call.1} parent=1 // pred_check
      _
    $region7: #{tpu_custom_call.1} parent=1 // pred_check_branch
      %24 = sbr.rel (0) target = $region9
    $region8: #{tpu_custom_call.1} parent=1 // pred_region
      %26 = vsyncadd [#allocation6], 0
      %s27 = sshll.u32 %s1, 4
      %s28 = int_to_ptr.hbm [resolvable:$true] %s27
      %s29 = sshll.u32 [#allocation5], 4
      %s30 = int_to_ptr.vmem [resolvable:$true] %s29
      %35 = dma.hbm_to_vmem [thread:$0]  %s28, 1408, %s30, [#allocation6], 64, 64, 4
    $region9: #{tpu_custom_call.1} parent=1 // pred_fallthru
      _
    // Predicated region
    $region10: #{tpu_custom_call.1} parent=1 // pred_check
      _
    $region11: #{tpu_custom_call.1} parent=1 // pred_check_branch
      %37 = sbr.rel (0) target = $region13
    $region12: #{tpu_custom_call.1} parent=1 // pred_region
      %39 = dma.done [#allocation3], 128
    $region13: #{tpu_custom_call.1} parent=1 // pred_fallthru
      _
    // Predicated region
    $region14: #{tpu_custom_call.1} parent=1 // pred_check
      _
    $region15: #{tpu_custom_call.1} parent=1 // pred_check_branch
      %41 = sbr.rel (0) target = $region17
    $region16: #{tpu_custom_call.1} parent=1 // pred_region
      %43 = dma.done [#allocation6], 1408
    $region17: #{tpu_custom_call.1} parent=1 // pred_fallthru
      _
    %v45 = vld [vmem:[#allocation2] sm:$0xf]
    %v46 = vld [vmem:[#allocation2 + $0x4] sm:$0xf]
    %v47 = vld [vmem:[#allocation5] sm:$0xf]
    %v48 = vld [vmem:[#allocation5 + $0x4] sm:$0xf]
    %v49 = vld [vmem:[#allocation5 + $0x8] sm:$0x1]
    %v50 = vunpack.c.l.bf16 %v49
    %v51 = vld [vmem:[#allocation5 + $0x10] sm:$0xf]
    %v52 = vld [vmem:[#allocation5 + $0x14] sm:$0xf]
    %v53 = vld [vmem:[#allocation5 + $0x18] sm:$0xf]
    %v54 = vld [vmem:[#allocation5 + $0x1c] sm:$0xf]
    %v55 = vld [vmem:[#allocation5 + $0x20] sm:$0xf]
    %v56 = vld [vmem:[#allocation5 + $0x24] sm:$0xf]
    %v57 = vld [vmem:[#allocation5 + $0x28] sm:$0xf]
    %v58 = vld [vmem:[#allocation5 + $0x2c] sm:$0xf]
    %v59 = vld [vmem:[#allocation5 + $0x30] sm:$0xf]
    %v60 = vld [vmem:[#allocation5 + $0x34] sm:$0xf]
    %v61 = vld [vmem:[#allocation5 + $0x38] sm:$0xf]
    %v62 = vld [vmem:[#allocation5 + $0x3c] sm:$0xf]
    %v63 = vld [vmem:[#allocation5 + $0x40] sm:$0xf]
    %v64 = vld [vmem:[#allocation5 + $0x44] sm:$0xf]
    %v65 = vld [vmem:[#allocation5 + $0x48] sm:$0xf]
    %v66 = vld [vmem:[#allocation5 + $0x4c] sm:$0xf]
    %v67 = vunpack.c.l.bf16 %v51
    %v68 = vunpack.c.l.bf16 %v52
    %v69 = vunpack.c.l.bf16 %v53
    %v70 = vunpack.c.l.bf16 %v54
    %v71 = vunpack.c.l.bf16 %v55
    %v72 = vunpack.c.l.bf16 %v56
    %v73 = vunpack.c.l.bf16 %v57
    %v74 = vunpack.c.l.bf16 %v58
    %v75 = vunpack.c.l.bf16 %v59
    %v76 = vunpack.c.l.bf16 %v60
    %v77 = vunpack.c.l.bf16 %v61
    %v78 = vunpack.c.l.bf16 %v62
    %v79 = vunpack.c.l.bf16 %v63
    %v80 = vunpack.c.l.bf16 %v64
    %v81 = vunpack.c.l.bf16 %v65
    %v82 = vunpack.c.l.bf16 %v66
    %v83 = vld [vmem:[#allocation5 + $0x50] sm:$0x1]
    %v84 = vunpack.c.l.bf16 %v83
    %v85 = vperm.slane %v50, 0
    %v88 = vunpack.c.l.b16 %v45
    %v89 = vunpack.c.l.b16 %v46
    %v90 = vpack.c.b16 %v89, %v88
    %v93 = vunpack.c.l.b16 %v47
    %v94 = vunpack.c.l.b16 %v48
    %v95 = vpack.c.b16 %v94, %v93
    %vm97 = vcmask 130048
    %v99 = vsel %vm97, %v90, 0
    %101 = vmatpush.bf16.msra.mxu0 0
    %102 = vmatpush.bf16.msra.mxu0 0
    %103 = vmatpush.bf16.msra.mxu0 0
    %104 = vmatpush.bf16.msra.mxu0 0
    %105 = vmatpush.bf16.msra.mxu0 0
    %106 = vmatpush.bf16.msra.mxu0 0
    %107 = vmatpush.bf16.msra.mxu0 0
    %108 = vmatpush.bf16.msra.mxu0 %v95
    %109 = vmatmul.bf16.gmra.mxu0 %v99
    %v110 = vpop.f32.mrf.mxu0
    %v111 = vadd.f32 %v85, %v110
    %v112 = vpop.f32.mrf.mxu0
    %v113 = vadd.f32 %v85, %v112
    %114 = vdwg.mxu0
    %v115 = vtanh.pop %v111
    %v116 = vtanh.pop %v113
    %v117 = vperm.slane %v84, 0
    %118 = vmatpush.msra.mxu0 %v82
    %119 = vmatpush.msra.mxu0 %v81
    %120 = vmatpush.msra.mxu0 %v80
    %121 = vmatpush.msra.mxu0 %v79
    %122 = vmatpush.msra.mxu0 %v78
    %123 = vmatpush.msra.mxu0 %v77
    %124 = vmatpush.msra.mxu0 %v76
    %125 = vmatpush.msra.mxu0 %v75
    %126 = vmatpush.msra.mxu0 %v74
    %127 = vmatpush.msra.mxu0 %v73
    %128 = vmatpush.msra.mxu0 %v72
    %129 = vmatpush.msra.mxu0 %v71
    %130 = vmatpush.msra.mxu0 %v70
    %131 = vmatpush.msra.mxu0 %v69
    %132 = vmatpush.msra.mxu0 %v68
    %133 = vmatpush.msra.mxu0 %v67
    %134 = vmatmul.f32.gmra.mxu0 %v115
    %v135 = vpop.f32.mrf.mxu0
    %v136 = vadd.f32 %v117, %v135
    %137 = vmatmul.f32.gmra.mxu0 %v116
    %v138 = vpop.f32.mrf.mxu0
    %v139 = vadd.f32 %v117, %v138
    %140 = vdwg.mxu0
    %141 = vst [vmem:[#allocation7] sm:$0xff] %v136
    %142 = vst [vmem:[#allocation7 + $0x8] sm:$0xff] %v139
    // Predicated region
    $region18: #{tpu_custom_call.1} parent=1 // pred_check
      _
    $region19: #{tpu_custom_call.1} parent=1 // pred_check_branch
      %144 = sbr.rel (0) target = $region21
    $region20: #{tpu_custom_call.1} parent=1 // pred_region
      %146 = vsyncadd [#allocation4], 0
      %s147 = sshll.u32 [#allocation7], 4
      %s148 = int_to_ptr.vmem [resolvable:$true] %s147
      %s149 = sshll.u32 %s2, 4
      %s150 = int_to_ptr.hbm [resolvable:$true] %s149
      %155 = dma.vmem_to_hbm [thread:$0]  %s148, 256, %s150, [#allocation4], 128, 128, 8
    $region21: #{tpu_custom_call.1} parent=1 // pred_fallthru
      _
    // Predicated region
    $region22: #{tpu_custom_call.1} parent=1 // pred_check
      _
    $region23: #{tpu_custom_call.1} parent=1 // pred_check_branch
      %157 = sbr.rel (0) target = $region25
    $region24: #{tpu_custom_call.1} parent=1 // pred_region
      %159 = dma.done [#allocation4], 256
    $region25: #{tpu_custom_call.1} parent=1 // pred_fallthru
      _
    %160 = vsyncpa [#allocation3], 1
    %161 = vsyncpa [#allocation6], 1
    %162 = vsyncpa [#allocation4], 1

</llo_original>
